<compile_context>
chip_gen: v7x
topology: tpu7x:2x2x1
jax: 0.10.0
libtpu: 0.0.40
codegen_flags: <defaults>
</compile_context>

<pallas_src>
import jax
import jax.numpy as jnp
from jax.experimental import pallas as pl
from jax.experimental.pallas import tpu as pltpu


def _round_up(x: int, m: int) -> int:
    return (x + m - 1) // m * m


def _tpu_config():
    """Per-TPU-generation tiling / VMEM knobs (perf-review items 5/6/7)."""
    try:
        kind = jax.devices()[0].device_kind.lower()
    except Exception:
        kind = ""
    if "v7" in kind:
        # 64 MiB VMEM (32 MiB default scoped): cap the limit at ~48 MiB and keep
        # >=2 tiles per TensorCore on the "parallel" M axis (min_tiles=4).
        return dict(tm=1024, min_tiles=4, vmem=48 * 1024 * 1024)
    if "v6" in kind:
        # 128 MiB VMEM: large tiles amortise the ~0.35 us/step pipeline overhead.
        return dict(tm=1024, min_tiles=1, vmem=64 * 1024 * 1024)
    if "v5" in kind:
        # ~16 MiB default scoped VMEM: modest tiles + an explicit raised limit.
        return dict(tm=512, min_tiles=1, vmem=64 * 1024 * 1024)
    return dict(tm=512, min_tiles=1, vmem=None)


def _patch_linear_kernel(x_ref, w_ref, b_ref, o_ref):
    # x_ref: [TM, K] (compute dtype)   one tile of patch rows
    # w_ref: [K, E_pad] (compute dtype) resident across the grid
    # b_ref: [1, E_pad] f32
    # o_ref: [TM, E_pad] out dtype
    acc = jnp.dot(x_ref[...], w_ref[...], preferred_element_type=jnp.float32)
    o_ref[...] = (acc + b_ref[...]).astype(o_ref.dtype)


def prepare_patch_embedding_params(weight, bias, *, compute_dtype=jnp.bfloat16):
    """One-time parameter transform (fold weight.T / pad / cast out of forward).

    weight: [embed, patch_dim] (PyTorch nn.Linear layout); bias: [embed].
    Returns (w_ke, b_1e): [patch_dim, E_pad] in compute dtype, [1, E_pad] f32.
    """
    embed, patch_dim = weight.shape
    e_pad = _round_up(embed, 128)  # lane-dense output columns (no-op for 768)
    w_ke = jnp.pad(weight.T, ((0, 0), (0, e_pad - embed)))
    b_1e = jnp.pad(bias.reshape(1, embed), ((0, 0), (0, e_pad - embed)))
    if compute_dtype is not None:
        w_ke = w_ke.astype(compute_dtype)
    return w_ke, b_1e.astype(jnp.float32)


# Feature levels tried in order; cached once one succeeds so later calls do not
# re-pay a failed trace.  Level 0 = single-buffered W/bias (pl.Buffered(1)) +
# XLA input fusion of the rearrange; lower levels degrade gracefully for JAX
# versions that reject either option.  (Fallback resolves eagerly; under jit a
# rejection would surface at compile time instead.)
_FEATURE_LEVELS = (
    dict(single_buffer_weights=True, allow_fusion=True),
    dict(single_buffer_weights=False, allow_fusion=True),
    dict(single_buffer_weights=False, allow_fusion=False),
)
_feature_level = 0


def _run_with_fallback(run):
    global _feature_level
    last_err = None
    for lvl in range(_feature_level, len(_FEATURE_LEVELS)):
        try:
            out = run(**_FEATURE_LEVELS[lvl])
            _feature_level = lvl
            return out
        except Exception as e:  # unsupported option on this JAX: degrade
            last_err = e
    raise last_err


def patch_embedding_forward(x, w_ke, b_1e, patch_size, embed_size, *,
                            compute_dtype=jnp.bfloat16, out_dtype=None,
                            tm_target=None):
    """x: [B, C, H, W]; (w_ke, b_1e) from prepare_patch_embedding_params.
    Returns [B, num_patches, embed_size]."""
    B, C, H, W = x.shape
    s = patch_size
    h, w = H // s, W // s
    K, E_pad = w_ke.shape
    assert K == s * s * C, "weight patch_dim does not match x / patch_size"
    N = h * w
    M = B * N
    out_dtype = x.dtype if out_dtype is None else out_dtype
    cdt = x.dtype if compute_dtype is None else compute_dtype

    # --- rearrange 'b c (h s1) (w s2) -> b (h w) (s1 s2 c)' (XLA glue) ---
    # Cast first so an unfused transpose moves bf16 (half the HBM bytes);
    # allow_input_fusion (below) lets XLA fold this producer chain into the
    # kernel's input DMA rather than materialising x2d in HBM.
    xc = x.astype(cdt)
    x2d = jnp.transpose(xc.reshape(B, C, h, s, w, s),
                        (0, 2, 4, 3, 5, 1)).reshape(M, K)

    # --- tiling: per-generation TM, no M pad (ragged last block is masked) ---
    cfg = _tpu_config()
    tm_target = cfg["tm"] if tm_target is None else tm_target
    sublane = max(8, 32 // jnp.dtype(cdt).itemsize)
    TM = min(_round_up(tm_target, sublane), _round_up(M, sublane))
    if cfg["min_tiles"] > 1 and M > cfg["min_tiles"] * sublane:
        # Keep enough tiles on the "parallel" axis to balance v7x's 2 TCs.
        TM = min(TM, _round_up(pl.cdiv(M, cfg["min_tiles"]), sublane))
    grid = (pl.cdiv(M, TM),)

    itemsize = jnp.dtype(cdt).itemsize
    cost = pl.CostEstimate(
        flops=2 * M * K * E_pad,
        transcendentals=0,
        bytes_accessed=(M * K + K * E_pad) * itemsize
        + M * E_pad * jnp.dtype(out_dtype).itemsize,
    )

    def run(single_buffer_weights, allow_fusion):
        w_kw = (dict(pipeline_mode=pl.Buffered(1))
                if single_buffer_weights else {})
        grid_spec = pltpu.PrefetchScalarGridSpec(
            num_scalar_prefetch=0,
            grid=grid,
            in_specs=[
                pl.BlockSpec((TM, K), lambda i: (i, 0)),             # x tile
                pl.BlockSpec((K, E_pad), lambda i: (0, 0), **w_kw),  # W resident
                pl.BlockSpec((1, E_pad), lambda i: (0, 0), **w_kw),  # bias
            ],
            out_specs=pl.BlockSpec((TM, E_pad), lambda i: (i, 0)),
        )
        return pl.pallas_call(
            _patch_linear_kernel,
            out_shape=jax.ShapeDtypeStruct((M, E_pad), out_dtype),
            grid_spec=grid_spec,
            compiler_params=pltpu.CompilerParams(
                dimension_semantics=("parallel",),  # v7x: shard M across 2 TCs
                vmem_limit_bytes=cfg["vmem"],
                allow_input_fusion=([True, False, False]
                                    if allow_fusion else None),
            ),
            cost_estimate=cost,
        )(x2d, w_ke, b_1e)

    out2d = _run_with_fallback(run)

    if E_pad != embed_size:
        out2d = out2d[:, :embed_size]
    return out2d.reshape(B, N, embed_size)


if __name__ == "__main__":
    key = jax.random.PRNGKey(0)

    def make_case(k, B, C, H, W, patch, embed):
        kx, kw, kb = jax.random.split(k, 3)
        patch_dim = patch * patch * C
        bound = 1.0 / (patch_dim ** 0.5)
        x = jax.random.normal(kx, (B, C, H, W), dtype=jnp.float32)
        weight = jax.random.uniform(kw, (embed, patch_dim), minval=-bound,
                                    maxval=bound, dtype=jnp.float32)
        bias = jax.random.uniform(kb, (embed,), minval=-bound, maxval=bound,
                                  dtype=jnp.float32)
        return x, weight, bias

    def reference(x, weight, bias, patch, cast_dtype=None):
        B, C, H, W = x.shape
        h, w = H // patch, W // patch
        xp = jnp.transpose(x.reshape(B, C, h, patch, w, patch),
                           (0, 2, 4, 3, 5, 1)).reshape(B, h * w, -1)
        wt = weight.T
        if cast_dtype is not None:
            xp, wt = xp.astype(cast_dtype), wt.astype(cast_dtype)
        return jnp.dot(xp, wt, preferred_element_type=jnp.float32) + bias

    k1, k2 = jax.random.split(key)

    # Case 1: small shapes consistent with the module (B=2, C=4, 16x16,
    # patch=4, embed=32).
    B, C, H, W, patch, embed = 2, 4, 16, 16, 4, 32
    x, weight, bias = make_case(k1, B, C, H, W, patch, embed)
    w_ke, b_1e = prepare_patch_embedding_params(weight, bias)
    out = patch_embedding_forward(x, w_ke, b_1e, patch, embed)
    jax.block_until_ready(out)
    assert out.shape == (B, (H // patch) * (W // patch), embed)
    # Tight check vs a reference using the same bf16 casts (f32 accumulate),
    # loose check vs the full-f32 reference (bf16 input rounding).
    assert jnp.allclose(out, reference(x, weight, bias, patch, jnp.bfloat16),
                        atol=2e-3, rtol=2e-3)
    assert jnp.allclose(out, reference(x, weight, bias, patch),
                        atol=3e-2, rtol=3e-2)

    # Case 2 (review ask): ViT-like patch count — 2 * 14 * 14 = 392 patches,
    # small TM so multi-step pipelining, the ragged last block, and the
    # "parallel" M axis are actually exercised.
    B, C, H, W, patch, embed = 2, 3, 56, 56, 4, 128
    x, weight, bias = make_case(k2, B, C, H, W, patch, embed)
    w_ke, b_1e = prepare_patch_embedding_params(weight, bias)
    out = patch_embedding_forward(x, w_ke, b_1e, patch, embed, tm_target=128)
    jax.block_until_ready(out)
    assert out.shape == (B, 196, embed)
    assert jnp.allclose(out, reference(x, weight, bias, patch, jnp.bfloat16),
                        atol=2e-3, rtol=2e-3)
    assert jnp.allclose(out, reference(x, weight, bias, patch),
                        atol=3e-2, rtol=3e-2)

    print("KERNEL_OK")
</pallas_src>

<mosaic_0001>
module attributes {stable_mosaic.version = 11 : i64} {
  func.func @_patch_linear_kernel(%arg0: i32, %arg1: memref<32x64xbf16, #tpu.memory_space<vmem>>, %arg2: memref<64x128xbf16, #tpu.memory_space<vmem>>, %arg3: memref<1x128xf32, #tpu.memory_space<vmem>>, %arg4: memref<32x128xf32, #tpu.memory_space<vmem>>) attributes {dimension_semantics = [#tpu.dimension_semantics<parallel>], iteration_bounds = array<i64: 1>, scalar_prefetch = 0 : i64, scratch_operands = 0 : i64, tpu.core_type = #tpu.core_type<tc>, window_params = [{transform_indices = @transform_0, window_bounds = array<i64: 32, 64>}, {pipeline_mode = #tpu.pipeline_mode<synchronous>, transform_indices = @transform_1, window_bounds = array<i64: 64, 128>}, {pipeline_mode = #tpu.pipeline_mode<synchronous>, transform_indices = @transform_2, window_bounds = array<i64: 1, 128>}, {transform_indices = @transform_3, window_bounds = array<i64: 32, 128>}]} {
    %c0 = arith.constant 0 : index
    %c0_0 = arith.constant 0 : index
    %0 = vector.load %arg1[%c0, %c0_0] : memref<32x64xbf16, #tpu.memory_space<vmem>>, vector<32x64xbf16>
    %c0_1 = arith.constant 0 : index
    %c0_2 = arith.constant 0 : index
    %1 = vector.load %arg2[%c0_1, %c0_2] : memref<64x128xbf16, #tpu.memory_space<vmem>>, vector<64x128xbf16>
    %cst = arith.constant dense<0.000000e+00> : vector<32x128xf32>
    %2 = tpu.matmul %0, %1, %cst {dimension_numbers = #tpu.dot_dimension_numbers<[1], [0], [0], [1], [0, 0, 1, 1], [], []>} : vector<32x64xbf16>, vector<64x128xbf16>, vector<32x128xf32> -> vector<32x128xf32>
    %c0_3 = arith.constant 0 : index
    %c0_4 = arith.constant 0 : index
    %3 = vector.load %arg3[%c0_3, %c0_4] : memref<1x128xf32, #tpu.memory_space<vmem>>, vector<1x128xf32>
    %4 = vector.broadcast %3 : vector<1x128xf32> to vector<32x128xf32>
    %5 = arith.addf %2, %4 : vector<32x128xf32>
    %c0_5 = arith.constant 0 : index
    %c0_6 = arith.constant 0 : index
    %6 = vector.load %arg4[%c0_5, %c0_6] : memref<32x128xf32, #tpu.memory_space<vmem>>, vector<32x128xf32>
    tpu.vector_store %arg4[%c0_5, %c0_6], %5 {strides = array<i32>} : memref<32x128xf32, #tpu.memory_space<vmem>>, vector<32x128xf32>,
    return
  }
  func.func @transform_0(%arg0: i32) -> (i32, i32) {
    %c0_i32 = arith.constant 0 : i32
    %c0_i32_0 = arith.constant 0 : i32
    return %arg0, %c0_i32 : i32, i32
  }
  func.func @transform_1(%arg0: i32) -> (i32, i32) {
    %c0_i32 = arith.constant 0 : i32
    %c0_i32_0 = arith.constant 0 : i32
    %c0_i32_1 = arith.constant 0 : i32
    return %c0_i32, %c0_i32_0 : i32, i32
  }
  func.func @transform_2(%arg0: i32) -> (i32, i32) {
    %c0_i32 = arith.constant 0 : i32
    %c0_i32_0 = arith.constant 0 : i32
    %c0_i32_1 = arith.constant 0 : i32
    return %c0_i32, %c0_i32_0 : i32, i32
  }
  func.func @transform_3(%arg0: i32) -> (i32, i32) {
    %c0_i32 = arith.constant 0 : i32
    %c0_i32_0 = arith.constant 0 : i32
    return %arg0, %c0_i32 : i32, i32
  }
}

module attributes {stable_mosaic.version = 11 : i64} {
  func.func @_patch_linear_kernel(%arg0: i32, %arg1: memref<32x64xbf16, #tpu.memory_space<vmem>>, %arg2: memref<64x128xbf16, #tpu.memory_space<vmem>>, %arg3: memref<1x128xf32, #tpu.memory_space<vmem>>, %arg4: memref<32x128xf32, #tpu.memory_space<vmem>>) attributes {dimension_semantics = [#tpu.dimension_semantics<parallel>], iteration_bounds = array<i64: 1>, scalar_prefetch = 0 : i64, scratch_operands = 0 : i64, tpu.core_type = #tpu.core_type<tc>, window_params = [{transform_indices = @transform_0, window_bounds = array<i64: 32, 64>}, {pipeline_mode = #tpu.pipeline_mode<synchronous>, transform_indices = @transform_1, window_bounds = array<i64: 64, 128>}, {pipeline_mode = #tpu.pipeline_mode<synchronous>, transform_indices = @transform_2, window_bounds = array<i64: 1, 128>}, {transform_indices = @transform_3, window_bounds = array<i64: 32, 128>}]} {
    %c0 = arith.constant 0 : index
    %c0_0 = arith.constant 0 : index
    %0 = vector.load %arg1[%c0, %c0_0] : memref<32x64xbf16, #tpu.memory_space<vmem>>, vector<32x64xbf16>
    %c0_1 = arith.constant 0 : index
    %c0_2 = arith.constant 0 : index
    %1 = vector.load %arg2[%c0_1, %c0_2] : memref<64x128xbf16, #tpu.memory_space<vmem>>, vector<64x128xbf16>
    %cst = arith.constant dense<0.000000e+00> : vector<32x128xf32>
    %2 = tpu.matmul %0, %1, %cst {dimension_numbers = #tpu.dot_dimension_numbers<[1], [0], [0], [1], [0, 0, 1, 1], [], []>} : vector<32x64xbf16>, vector<64x128xbf16>, vector<32x128xf32> -> vector<32x128xf32>
    %c0_3 = arith.constant 0 : index
    %c0_4 = arith.constant 0 : index
    %3 = vector.load %arg3[%c0_3, %c0_4] : memref<1x128xf32, #tpu.memory_space<vmem>>, vector<1x128xf32>
    %4 = vector.broadcast %3 : vector<1x128xf32> to vector<32x128xf32>
    %5 = arith.addf %2, %4 : vector<32x128xf32>
    %c0_5 = arith.constant 0 : index
    %c0_6 = arith.constant 0 : index
    %6 = vector.load %arg4[%c0_5, %c0_6] : memref<32x128xf32, #tpu.memory_space<vmem>>, vector<32x128xf32>
    tpu.vector_store %arg4[%c0_5, %c0_6], %5 {strides = array<i32>} : memref<32x128xf32, #tpu.memory_space<vmem>>, vector<32x128xf32>,
    return
  }
  func.func @transform_0(%arg0: i32) -> (i32, i32) {
    %c0_i32 = arith.constant 0 : i32
    %c0_i32_0 = arith.constant 0 : i32
    return %arg0, %c0_i32 : i32, i32
  }
  func.func @transform_1(%arg0: i32) -> (i32, i32) {
    %c0_i32 = arith.constant 0 : i32
    %c0_i32_0 = arith.constant 0 : i32
    %c0_i32_1 = arith.constant 0 : i32
    return %c0_i32, %c0_i32_0 : i32, i32
  }
  func.func @transform_2(%arg0: i32) -> (i32, i32) {
    %c0_i32 = arith.constant 0 : i32
    %c0_i32_0 = arith.constant 0 : i32
    %c0_i32_1 = arith.constant 0 : i32
    return %c0_i32, %c0_i32_0 : i32, i32
  }
  func.func @transform_3(%arg0: i32) -> (i32, i32) {
    %c0_i32 = arith.constant 0 : i32
    %c0_i32_0 = arith.constant 0 : i32
    return %arg0, %c0_i32 : i32, i32
  }
}

module attributes {stable_mosaic.version = 11 : i64} {
  func.func @_patch_linear_kernel(%arg0: i32, %arg1: memref<32x64xbf16, #tpu.memory_space<vmem>>, %arg2: memref<64x128xbf16, #tpu.memory_space<vmem>>, %arg3: memref<1x128xf32, #tpu.memory_space<vmem>>, %arg4: memref<32x128xf32, #tpu.memory_space<vmem>>) attributes {dimension_semantics = [#tpu.dimension_semantics<parallel>], iteration_bounds = array<i64: 1>, scalar_prefetch = 0 : i64, scratch_operands = 0 : i64, tpu.core_type = #tpu.core_type<tc>, window_params = [{transform_indices = @transform_0, window_bounds = array<i64: 32, 64>}, {pipeline_mode = #tpu.pipeline_mode<synchronous>, transform_indices = @transform_1, window_bounds = array<i64: 64, 128>}, {pipeline_mode = #tpu.pipeline_mode<synchronous>, transform_indices = @transform_2, window_bounds = array<i64: 1, 128>}, {transform_indices = @transform_3, window_bounds = array<i64: 32, 128>}]} {
    %c0 = arith.constant 0 : index
    %c0_0 = arith.constant 0 : index
    %0 = vector.load %arg1[%c0, %c0_0] : memref<32x64xbf16, #tpu.memory_space<vmem>>, vector<32x64xbf16>
    %c0_1 = arith.constant 0 : index
    %c0_2 = arith.constant 0 : index
    %1 = vector.load %arg2[%c0_1, %c0_2] : memref<64x128xbf16, #tpu.memory_space<vmem>>, vector<64x128xbf16>
    %cst = arith.constant dense<0.000000e+00> : vector<32x128xf32>
    %2 = tpu.matmul %0, %1, %cst {dimension_numbers = #tpu.dot_dimension_numbers<[1], [0], [0], [1], [0, 0, 1, 1], [], []>} : vector<32x64xbf16>, vector<64x128xbf16>, vector<32x128xf32> -> vector<32x128xf32>
    %c0_3 = arith.constant 0 : index
    %c0_4 = arith.constant 0 : index
    %3 = vector.load %arg3[%c0_3, %c0_4] : memref<1x128xf32, #tpu.memory_space<vmem>>, vector<1x128xf32>
    %4 = vector.broadcast %3 : vector<1x128xf32> to vector<32x128xf32>
    %5 = arith.addf %2, %4 : vector<32x128xf32>
    %c0_5 = arith.constant 0 : index
    %c0_6 = arith.constant 0 : index
    %6 = vector.load %arg4[%c0_5, %c0_6] : memref<32x128xf32, #tpu.memory_space<vmem>>, vector<32x128xf32>
    tpu.vector_store %arg4[%c0_5, %c0_6], %5 {strides = array<i32>} : memref<32x128xf32, #tpu.memory_space<vmem>>, vector<32x128xf32>,
    return
  }
  func.func @transform_0(%arg0: i32) -> (i32, i32) {
    %c0_i32 = arith.constant 0 : i32
    %c0_i32_0 = arith.constant 0 : i32
    return %arg0, %c0_i32 : i32, i32
  }
  func.func @transform_1(%arg0: i32) -> (i32, i32) {
    %c0_i32 = arith.constant 0 : i32
    %c0_i32_0 = arith.constant 0 : i32
    %c0_i32_1 = arith.constant 0 : i32
    return %c0_i32, %c0_i32_0 : i32, i32
  }
  func.func @transform_2(%arg0: i32) -> (i32, i32) {
    %c0_i32 = arith.constant 0 : i32
    %c0_i32_0 = arith.constant 0 : i32
    %c0_i32_1 = arith.constant 0 : i32
    return %c0_i32, %c0_i32_0 : i32, i32
  }
  func.func @transform_3(%arg0: i32) -> (i32, i32) {
    %c0_i32 = arith.constant 0 : i32
    %c0_i32_0 = arith.constant 0 : i32
    return %arg0, %c0_i32 : i32, i32
  }
}

</mosaic_0001>

<llo_original>
// kernel: tpu_custom_call.1
$region0: #{tpu_custom_call.1}
  #allocation0 [shape = 'u32[]', space=smem, size = 0x4, offset = 0x4, fixed_abs, tag = 'smem constant byte address 0x4 - core index']
  #allocation1 [shape = 'u32[144,128]{1,0:T(1,128)}', space=vmem, size = 0x12000, scoped, tag = 'internal scratch']
  %s0 = inlined_call_operand.hbm [shape: bf16[32,64], index: 0, kind: input, shape index: {}]
  %s1 = inlined_call_operand.hbm [shape: bf16[64,128], index: 1, kind: input, shape index: {}]
  %s2 = inlined_call_operand.vmem [shape: f32[1,128], index: 2, kind: input, shape index: {}]
  %s3 = inlined_call_operand.hbm [shape: f32[32,128], index: 3, kind: output, shape index: {}]
  %s4 = sld [smem:[#allocation0]]
  $region30: #{tpu_custom_call.1} parent=0
    _
  %s6 = ssub.s32 1, %s4
  %s7 = scalar_select 0, %s6, %s4
  $region1: #{tpu_custom_call.1} parent=0
    #allocation2 [shape = 'u8[8192]{0}', space=vmem, size = 0x2000, scoped, tag = 'input window, operand 0, single buffered']
    #allocation3 [shape = 's32[1]{0}', space=sflag, size = 0x4, scoped, tag = 'scoped memory for tpu_custom_call.1']
    #allocation4 [shape = 's32[1]{0}', space=sflag, size = 0x4, scoped, tag = 'scoped memory for tpu_custom_call.1']
    #allocation5 [shape = 'u8[16384]{0}', space=vmem, size = 0x4000, scoped, tag = 'input window, operand 1, single buffered']
    #allocation6 [shape = 's32[1]{0}', space=sflag, size = 0x4, scoped, tag = 'scoped memory for tpu_custom_call.1']
    #allocation7 [shape = 'u8[16384]{0}', space=vmem, size = 0x4000, scoped, tag = 'output window, operand 0, single buffered']
    %8 = vsyncpa [#allocation3], 0
    %9 = vsyncpa [#allocation6], 0
    %10 = vsyncpa [#allocation4], 0
    // Predicated region
    $region2: #{tpu_custom_call.1} parent=1 // pred_check
      _
    $region3: #{tpu_custom_call.1} parent=1 // pred_check_branch
      %12 = sbr.rel (0) target = $region5
    $region4: #{tpu_custom_call.1} parent=1 // pred_region
      %s14 = ssub.s32 256, 256
      %15 = vsyncadd [#allocation3], %s14
      %s16 = sshll.u32 [#allocation2], 4
      %s17 = int_to_ptr.vmem [resolvable:$true] %s16
      %22 = dma.hbm_to_vmem [thread:$0]  %s0, 256, %s17, [#allocation3], 64, 64, 4
    $region5: #{tpu_custom_call.1} parent=1 // pred_fallthru
      _
    // Predicated region
    $region6: #{tpu_custom_call.1} parent=1 // pred_check
      _
    $region7: #{tpu_custom_call.1} parent=1 // pred_check_branch
      %24 = sbr.rel (0) target = $region9
    $region8: #{tpu_custom_call.1} parent=1 // pred_region
      %s26 = ssub.s32 512, 512
      %27 = vsyncadd [#allocation6], %s26
      %s28 = sshll.u32 [#allocation5], 4
      %s29 = int_to_ptr.vmem [resolvable:$true] %s28
      %34 = dma.hbm_to_vmem [thread:$0]  %s1, 512, %s29, [#allocation6], 64, 64, 4
    $region9: #{tpu_custom_call.1} parent=1 // pred_fallthru
      _
    // Predicated region
    $region10: #{tpu_custom_call.1} parent=1 // pred_check
      _
    $region11: #{tpu_custom_call.1} parent=1 // pred_check_branch
      %36 = sbr.rel (0) target = $region13
    $region12: #{tpu_custom_call.1} parent=1 // pred_region
      _
    $region13: #{tpu_custom_call.1} parent=1 // pred_fallthru
      _
    // Predicated region
    $region14: #{tpu_custom_call.1} parent=1 // pred_check
      _
    $region15: #{tpu_custom_call.1} parent=1 // pred_check_branch
      %38 = sbr.rel (0) target = $region17
    $region16: #{tpu_custom_call.1} parent=1 // pred_region
      %39 = dma.done [#allocation3], 256
    $region17: #{tpu_custom_call.1} parent=1 // pred_fallthru
      _
    // Predicated region
    $region18: #{tpu_custom_call.1} parent=1 // pred_check
      _
    $region19: #{tpu_custom_call.1} parent=1 // pred_check_branch
      %41 = sbr.rel (0) target = $region21
    $region20: #{tpu_custom_call.1} parent=1 // pred_region
      %42 = dma.done [#allocation6], 512
    $region21: #{tpu_custom_call.1} parent=1 // pred_fallthru
      _
    %v44 = vld [vmem:[#allocation2] sm:$0xf]
    %v45 = vld [vmem:[#allocation2 + $0x4] sm:$0xf]
    %v46 = vld [vmem:[#allocation2 + $0x8] sm:$0xf]
    %v47 = vld [vmem:[#allocation2 + $0xc] sm:$0xf]
    %v48 = vld [vmem:[#allocation5] sm:$0xf]
    %v49 = vld [vmem:[#allocation5 + $0x4] sm:$0xf]
    %v50 = vld [vmem:[#allocation5 + $0x8] sm:$0xf]
    %v51 = vld [vmem:[#allocation5 + $0xc] sm:$0xf]
    %v52 = vld [vmem:[#allocation5 + $0x10] sm:$0xf]
    %v53 = vld [vmem:[#allocation5 + $0x14] sm:$0xf]
    %v54 = vld [vmem:[#allocation5 + $0x18] sm:$0xf]
    %v55 = vld [vmem:[#allocation5 + $0x1c] sm:$0xf]
    %v56 = vld [vmem:[%s2] sm:$0x1]
    %v58 = vlaneseq
    %v59 = vshrl.u32 %v58, 7
    %v60 = vsub.s32 0, %v59
    %v61 = vrot.slane %v56, %v60
    %v67 = vunpack.c.l.b16 %v44
    %v68 = vunpack.c.l.b16 %v45
    %v69 = vunpack.c.l.b16 %v46
    %v70 = vunpack.c.l.b16 %v47
    %v71 = vpack.c.b16 %v68, %v67
    %v72 = vpack.c.b16 %v70, %v69
    %v81 = vunpack.c.l.b16 %v48
    %v82 = vunpack.c.l.b16 %v49
    %v83 = vunpack.c.l.b16 %v50
    %v84 = vunpack.c.l.b16 %v51
    %v85 = vunpack.c.l.b16 %v52
    %v86 = vunpack.c.l.b16 %v53
    %v87 = vunpack.c.l.b16 %v54
    %v88 = vunpack.c.l.b16 %v55
    %v89 = vpack.c.b16 %v82, %v81
    %v90 = vpack.c.b16 %v84, %v83
    %v91 = vpack.c.b16 %v86, %v85
    %v92 = vpack.c.b16 %v88, %v87
    %vm97 = vcmask 523264
    %v99 = vsel %vm97, %v71, 0
    %v102 = vsel %vm97, %v72, 0
    %104 = vmatprep.subr.bf16.mxu0 0
    %105 = vmatpush1.bf16.msra.mxu0 %v89
    %106 = vmatprep.subr.bf16.mxu0 0
    %107 = vmatpush1.bf16.msra.mxu0 %v90
    %108 = vmatprep.subr.bf16.mxu0 0
    %109 = vmatpush1.bf16.msra.mxu0 %v91
    %110 = vmatprep.subr.bf16.mxu0 0
    %111 = vmatpush1.bf16.msra.mxu0 %v92
    %112 = vmatprep.subr.bf16.mxu0 0
    %113 = vmatpush1.bf16.msra.mxu0 0
    %114 = vmatprep.subr.bf16.mxu0 0
    %115 = vmatpush1.bf16.msra.mxu0 0
    %116 = vmatprep.subr.bf16.mxu0 0
    %117 = vmatpush1.bf16.msra.mxu0 0
    %118 = vmatprep.subr.bf16.mxu0 0
    %119 = vmatpush1.bf16.msra.mxu0 0
    %120 = vmatprep.subr.bf16.mxu0 0
    %121 = vmatpush1.bf16.msra.mxu0 0
    %122 = vmatprep.subr.bf16.mxu0 0
    %123 = vmatpush1.bf16.msra.mxu0 0
    %124 = vmatprep.subr.bf16.mxu0 0
    %125 = vmatpush1.bf16.msra.mxu0 0
    %126 = vmatprep.subr.bf16.mxu0 0
    %127 = vmatpush1.bf16.msra.mxu0 0
    %128 = vmatprep.subr.bf16.mxu0 0
    %129 = vmatpush1.bf16.msra.mxu0 0
    %130 = vmatprep.subr.bf16.mxu0 0
    %131 = vmatpush1.bf16.msra.mxu0 0
    %132 = vmatprep.subr.bf16.mxu0 0
    %133 = vmatpush1.bf16.msra.mxu0 0
    %134 = vmatprep.subr.bf16.mxu0 0
    %135 = vmatpush1.bf16.msra.mxu0 0
    %136 = vmatprep.mubr.bf16.mxu0 0
    %137 = vmatmul.mubr.bf16.gmra.mrb[0].mxu0 %v99
    %v138 = vpop.f32.mrb[0].mxu0
    %v139 = vadd.f32 %v61, %v138
    %v140 = vpop.f32.mrb[0].mxu0
    %v141 = vpop.f32.mrb[0].mxu0
    %v142 = vadd.f32 %v61, %v141
    %v143 = vpop.f32.mrb[0].mxu0
    %144 = vmatprep.mubr.bf16.mxu0 0
    %145 = vmatmul.mubr.bf16.gmra.mrb[0].mxu0 %v102
    %v146 = vpop.f32.mrb[0].mxu0
    %v147 = vadd.f32 %v61, %v146
    %v148 = vpop.f32.mrb[0].mxu0
    %v149 = vpop.f32.mrb[0].mxu0
    %v150 = vadd.f32 %v61, %v149
    %v151 = vpop.f32.mrb[0].mxu0
    %152 = vdwg.mxu0
    %153 = vst [vmem:[#allocation7] sm:$0xff] %v139
    %154 = vst [vmem:[#allocation7 + $0x8] sm:$0xff] %v142
    %155 = vst [vmem:[#allocation7 + $0x10] sm:$0xff] %v147
    %156 = vst [vmem:[#allocation7 + $0x18] sm:$0xff] %v150
    // Predicated region
    $region22: #{tpu_custom_call.1} parent=1 // pred_check
      _
    $region23: #{tpu_custom_call.1} parent=1 // pred_check_branch
      %158 = sbr.rel (0) target = $region25
    $region24: #{tpu_custom_call.1} parent=1 // pred_region
      %s160 = ssub.s32 512, 512
      %161 = vsyncadd [#allocation4], %s160
      %s162 = sshll.u32 [#allocation7], 4
      %s163 = int_to_ptr.vmem [resolvable:$true] %s162
      %168 = dma.vmem_to_hbm [thread:$0]  %s163, 512, %s3, [#allocation4], 128, 128, 8
    $region25: #{tpu_custom_call.1} parent=1 // pred_fallthru
      _
    // Predicated region
    $region26: #{tpu_custom_call.1} parent=1 // pred_check
      _
    $region27: #{tpu_custom_call.1} parent=1 // pred_check_branch
      %170 = sbr.rel (0) target = $region29
    $region28: #{tpu_custom_call.1} parent=1 // pred_region
      %171 = dma.done [#allocation4], 512
    $region29: #{tpu_custom_call.1} parent=1 // pred_fallthru
      _
    %172 = vsyncpa [#allocation3], 1
    %173 = vsyncpa [#allocation6], 1
    %174 = vsyncpa [#allocation4], 1

// kernel: tpu_custom_call.1
$region0: #{tpu_custom_call.1}
  #allocation0 [shape = 'u32[]', space=smem, size = 0x4, offset = 0x4, fixed_abs, tag = 'smem constant byte address 0x4 - core index']
  #allocation1 [shape = 'u32[144,128]{1,0:T(1,128)}', space=vmem, size = 0x12000, scoped, tag = 'internal scratch']
  %s0 = inlined_call_operand.hbm [shape: bf16[32,64], index: 0, kind: input, shape index: {}]
  %s1 = inlined_call_operand.hbm [shape: bf16[64,128], index: 1, kind: input, shape index: {}]
  %s2 = inlined_call_operand.vmem [shape: f32[1,128], index: 2, kind: input, shape index: {}]
  %s3 = inlined_call_operand.hbm [shape: f32[32,128], index: 3, kind: output, shape index: {}]
  %s4 = sld [smem:[#allocation0]]
  $region30: #{tpu_custom_call.1} parent=0
    _
  %s6 = ssub.s32 1, %s4
  %s7 = scalar_select 0, %s6, %s4
  $region1: #{tpu_custom_call.1} parent=0
    #allocation2 [shape = 'u8[8192]{0}', space=vmem, size = 0x2000, scoped, tag = 'input window, operand 0, single buffered']
    #allocation3 [shape = 's32[1]{0}', space=sflag, size = 0x4, scoped, tag = 'scoped memory for tpu_custom_call.1']
    #allocation4 [shape = 's32[1]{0}', space=sflag, size = 0x4, scoped, tag = 'scoped memory for tpu_custom_call.1']
    #allocation5 [shape = 'u8[16384]{0}', space=vmem, size = 0x4000, scoped, tag = 'input window, operand 1, single buffered']
    #allocation6 [shape = 's32[1]{0}', space=sflag, size = 0x4, scoped, tag = 'scoped memory for tpu_custom_call.1']
    #allocation7 [shape = 'u8[16384]{0}', space=vmem, size = 0x4000, scoped, tag = 'output window, operand 0, single buffered']
    %8 = vsyncpa [#allocation3], 0
    %9 = vsyncpa [#allocation6], 0
    %10 = vsyncpa [#allocation4], 0
    // Predicated region
    $region2: #{tpu_custom_call.1} parent=1 // pred_check
      _
    $region3: #{tpu_custom_call.1} parent=1 // pred_check_branch
      %12 = sbr.rel (0) target = $region5
    $region4: #{tpu_custom_call.1} parent=1 // pred_region
      %s14 = ssub.s32 256, 256
      %15 = vsyncadd [#allocation3], %s14
      %s16 = sshll.u32 [#allocation2], 4
      %s17 = int_to_ptr.vmem [resolvable:$true] %s16
      %22 = dma.hbm_to_vmem [thread:$0]  %s0, 256, %s17, [#allocation3], 64, 64, 4
    $region5: #{tpu_custom_call.1} parent=1 // pred_fallthru
      _
    // Predicated region
    $region6: #{tpu_custom_call.1} parent=1 // pred_check
      _
    $region7: #{tpu_custom_call.1} parent=1 // pred_check_branch
      %24 = sbr.rel (0) target = $region9
    $region8: #{tpu_custom_call.1} parent=1 // pred_region
      %s26 = ssub.s32 512, 512
      %27 = vsyncadd [#allocation6], %s26
      %s28 = sshll.u32 [#allocation5], 4
      %s29 = int_to_ptr.vmem [resolvable:$true] %s28
      %34 = dma.hbm_to_vmem [thread:$0]  %s1, 512, %s29, [#allocation6], 64, 64, 4
    $region9: #{tpu_custom_call.1} parent=1 // pred_fallthru
      _
    // Predicated region
    $region10: #{tpu_custom_call.1} parent=1 // pred_check
      _
    $region11: #{tpu_custom_call.1} parent=1 // pred_check_branch
      %36 = sbr.rel (0) target = $region13
    $region12: #{tpu_custom_call.1} parent=1 // pred_region
      _
    $region13: #{tpu_custom_call.1} parent=1 // pred_fallthru
      _
    // Predicated region
    $region14: #{tpu_custom_call.1} parent=1 // pred_check
      _
    $region15: #{tpu_custom_call.1} parent=1 // pred_check_branch
      %38 = sbr.rel (0) target = $region17
    $region16: #{tpu_custom_call.1} parent=1 // pred_region
      %39 = dma.done [#allocation3], 256
    $region17: #{tpu_custom_call.1} parent=1 // pred_fallthru
      _
    // Predicated region
    $region18: #{tpu_custom_call.1} parent=1 // pred_check
      _
    $region19: #{tpu_custom_call.1} parent=1 // pred_check_branch
      %41 = sbr.rel (0) target = $region21
    $region20: #{tpu_custom_call.1} parent=1 // pred_region
      %42 = dma.done [#allocation6], 512
    $region21: #{tpu_custom_call.1} parent=1 // pred_fallthru
      _
    %v44 = vld [vmem:[#allocation2] sm:$0xf]
    %v45 = vld [vmem:[#allocation2 + $0x4] sm:$0xf]
    %v46 = vld [vmem:[#allocation2 + $0x8] sm:$0xf]
    %v47 = vld [vmem:[#allocation2 + $0xc] sm:$0xf]
    %v48 = vld [vmem:[#allocation5] sm:$0xf]
    %v49 = vld [vmem:[#allocation5 + $0x4] sm:$0xf]
    %v50 = vld [vmem:[#allocation5 + $0x8] sm:$0xf]
    %v51 = vld [vmem:[#allocation5 + $0xc] sm:$0xf]
    %v52 = vld [vmem:[#allocation5 + $0x10] sm:$0xf]
    %v53 = vld [vmem:[#allocation5 + $0x14] sm:$0xf]
    %v54 = vld [vmem:[#allocation5 + $0x18] sm:$0xf]
    %v55 = vld [vmem:[#allocation5 + $0x1c] sm:$0xf]
    %v56 = vld [vmem:[%s2] sm:$0x1]
    %v58 = vlaneseq
    %v59 = vshrl.u32 %v58, 7
    %v60 = vsub.s32 0, %v59
    %v61 = vrot.slane %v56, %v60
    %v67 = vunpack.c.l.b16 %v44
    %v68 = vunpack.c.l.b16 %v45
    %v69 = vunpack.c.l.b16 %v46
    %v70 = vunpack.c.l.b16 %v47
    %v71 = vpack.c.b16 %v68, %v67
    %v72 = vpack.c.b16 %v70, %v69
    %v81 = vunpack.c.l.b16 %v48
    %v82 = vunpack.c.l.b16 %v49
    %v83 = vunpack.c.l.b16 %v50
    %v84 = vunpack.c.l.b16 %v51
    %v85 = vunpack.c.l.b16 %v52
    %v86 = vunpack.c.l.b16 %v53
    %v87 = vunpack.c.l.b16 %v54
    %v88 = vunpack.c.l.b16 %v55
    %v89 = vpack.c.b16 %v82, %v81
    %v90 = vpack.c.b16 %v84, %v83
    %v91 = vpack.c.b16 %v86, %v85
    %v92 = vpack.c.b16 %v88, %v87
    %vm97 = vcmask 523264
    %v99 = vsel %vm97, %v71, 0
    %v102 = vsel %vm97, %v72, 0
    %104 = vmatprep.subr.bf16.mxu0 0
    %105 = vmatpush1.bf16.msra.mxu0 %v89
    %106 = vmatprep.subr.bf16.mxu0 0
    %107 = vmatpush1.bf16.msra.mxu0 %v90
    %108 = vmatprep.subr.bf16.mxu0 0
    %109 = vmatpush1.bf16.msra.mxu0 %v91
    %110 = vmatprep.subr.bf16.mxu0 0
    %111 = vmatpush1.bf16.msra.mxu0 %v92
    %112 = vmatprep.subr.bf16.mxu0 0
    %113 = vmatpush1.bf16.msra.mxu0 0
    %114 = vmatprep.subr.bf16.mxu0 0
    %115 = vmatpush1.bf16.msra.mxu0 0
    %116 = vmatprep.subr.bf16.mxu0 0
    %117 = vmatpush1.bf16.msra.mxu0 0
    %118 = vmatprep.subr.bf16.mxu0 0
    %119 = vmatpush1.bf16.msra.mxu0 0
    %120 = vmatprep.subr.bf16.mxu0 0
    %121 = vmatpush1.bf16.msra.mxu0 0
    %122 = vmatprep.subr.bf16.mxu0 0
    %123 = vmatpush1.bf16.msra.mxu0 0
    %124 = vmatprep.subr.bf16.mxu0 0
    %125 = vmatpush1.bf16.msra.mxu0 0
    %126 = vmatprep.subr.bf16.mxu0 0
    %127 = vmatpush1.bf16.msra.mxu0 0
    %128 = vmatprep.subr.bf16.mxu0 0
    %129 = vmatpush1.bf16.msra.mxu0 0
    %130 = vmatprep.subr.bf16.mxu0 0
    %131 = vmatpush1.bf16.msra.mxu0 0
    %132 = vmatprep.subr.bf16.mxu0 0
    %133 = vmatpush1.bf16.msra.mxu0 0
    %134 = vmatprep.subr.bf16.mxu0 0
    %135 = vmatpush1.bf16.msra.mxu0 0
    %136 = vmatprep.mubr.bf16.mxu0 0
    %137 = vmatmul.mubr.bf16.gmra.mrb[0].mxu0 %v99
    %v138 = vpop.f32.mrb[0].mxu0
    %v139 = vadd.f32 %v61, %v138
    %v140 = vpop.f32.mrb[0].mxu0
    %v141 = vpop.f32.mrb[0].mxu0
    %v142 = vadd.f32 %v61, %v141
    %v143 = vpop.f32.mrb[0].mxu0
    %144 = vmatprep.mubr.bf16.mxu0 0
    %145 = vmatmul.mubr.bf16.gmra.mrb[0].mxu0 %v102
    %v146 = vpop.f32.mrb[0].mxu0
    %v147 = vadd.f32 %v61, %v146
    %v148 = vpop.f32.mrb[0].mxu0
    %v149 = vpop.f32.mrb[0].mxu0
    %v150 = vadd.f32 %v61, %v149
    %v151 = vpop.f32.mrb[0].mxu0
    %152 = vdwg.mxu0
    %153 = vst [vmem:[#allocation7] sm:$0xff] %v139
    %154 = vst [vmem:[#allocation7 + $0x8] sm:$0xff] %v142
    %155 = vst [vmem:[#allocation7 + $0x10] sm:$0xff] %v147
    %156 = vst [vmem:[#allocation7 + $0x18] sm:$0xff] %v150
    // Predicated region
    $region22: #{tpu_custom_call.1} parent=1 // pred_check
      _
    $region23: #{tpu_custom_call.1} parent=1 // pred_check_branch
      %158 = sbr.rel (0) target = $region25
    $region24: #{tpu_custom_call.1} parent=1 // pred_region
      %s160 = ssub.s32 512, 512
      %161 = vsyncadd [#allocation4], %s160
      %s162 = sshll.u32 [#allocation7], 4
      %s163 = int_to_ptr.vmem [resolvable:$true] %s162
      %168 = dma.vmem_to_hbm [thread:$0]  %s163, 512, %s3, [#allocation4], 128, 128, 8
    $region25: #{tpu_custom_call.1} parent=1 // pred_fallthru
      _
    // Predicated region
    $region26: #{tpu_custom_call.1} parent=1 // pred_check
      _
    $region27: #{tpu_custom_call.1} parent=1 // pred_check_branch
      %170 = sbr.rel (0) target = $region29
    $region28: #{tpu_custom_call.1} parent=1 // pred_region
      %171 = dma.done [#allocation4], 512
    $region29: #{tpu_custom_call.1} parent=1 // pred_fallthru
      _
    %172 = vsyncpa [#allocation3], 1
    %173 = vsyncpa [#allocation6], 1
    %174 = vsyncpa [#allocation4], 1

// kernel: tpu_custom_call.1
$region0: #{tpu_custom_call.1}
  #allocation0 [shape = 'u32[]', space=smem, size = 0x4, offset = 0x4, fixed_abs, tag = 'smem constant byte address 0x4 - core index']
  #allocation1 [shape = 'u32[144,128]{1,0:T(1,128)}', space=vmem, size = 0x12000, scoped, tag = 'internal scratch']
  %s0 = inlined_call_operand.hbm [shape: bf16[32,64], index: 0, kind: input, shape index: {}]
  %s1 = inlined_call_operand.hbm [shape: bf16[64,128], index: 1, kind: input, shape index: {}]
  %s2 = inlined_call_operand.vmem [shape: f32[1,128], index: 2, kind: input, shape index: {}]
  %s3 = inlined_call_operand.hbm [shape: f32[32,128], index: 3, kind: output, shape index: {}]
  %s4 = sld [smem:[#allocation0]]
  $region30: #{tpu_custom_call.1} parent=0
    _
  %s6 = ssub.s32 1, %s4
  %s7 = scalar_select 0, %s6, %s4
  $region1: #{tpu_custom_call.1} parent=0
    #allocation2 [shape = 'u8[8192]{0}', space=vmem, size = 0x2000, scoped, tag = 'input window, operand 0, single buffered']
    #allocation3 [shape = 's32[1]{0}', space=sflag, size = 0x4, scoped, tag = 'scoped memory for tpu_custom_call.1']
    #allocation4 [shape = 's32[1]{0}', space=sflag, size = 0x4, scoped, tag = 'scoped memory for tpu_custom_call.1']
    #allocation5 [shape = 'u8[16384]{0}', space=vmem, size = 0x4000, scoped, tag = 'input window, operand 1, single buffered']
    #allocation6 [shape = 's32[1]{0}', space=sflag, size = 0x4, scoped, tag = 'scoped memory for tpu_custom_call.1']
    #allocation7 [shape = 'u8[16384]{0}', space=vmem, size = 0x4000, scoped, tag = 'output window, operand 0, single buffered']
    %8 = vsyncpa [#allocation3], 0
    %9 = vsyncpa [#allocation6], 0
    %10 = vsyncpa [#allocation4], 0
    // Predicated region
    $region2: #{tpu_custom_call.1} parent=1 // pred_check
      _
    $region3: #{tpu_custom_call.1} parent=1 // pred_check_branch
      %12 = sbr.rel (0) target = $region5
    $region4: #{tpu_custom_call.1} parent=1 // pred_region
      %s14 = ssub.s32 256, 256
      %15 = vsyncadd [#allocation3], %s14
      %s16 = sshll.u32 [#allocation2], 4
      %s17 = int_to_ptr.vmem [resolvable:$true] %s16
      %22 = dma.hbm_to_vmem [thread:$0]  %s0, 256, %s17, [#allocation3], 64, 64, 4
    $region5: #{tpu_custom_call.1} parent=1 // pred_fallthru
      _
    // Predicated region
    $region6: #{tpu_custom_call.1} parent=1 // pred_check
      _
    $region7: #{tpu_custom_call.1} parent=1 // pred_check_branch
      %24 = sbr.rel (0) target = $region9
    $region8: #{tpu_custom_call.1} parent=1 // pred_region
      %s26 = ssub.s32 512, 512
      %27 = vsyncadd [#allocation6], %s26
      %s28 = sshll.u32 [#allocation5], 4
      %s29 = int_to_ptr.vmem [resolvable:$true] %s28
      %34 = dma.hbm_to_vmem [thread:$0]  %s1, 512, %s29, [#allocation6], 64, 64, 4
    $region9: #{tpu_custom_call.1} parent=1 // pred_fallthru
      _
    // Predicated region
    $region10: #{tpu_custom_call.1} parent=1 // pred_check
      _
    $region11: #{tpu_custom_call.1} parent=1 // pred_check_branch
      %36 = sbr.rel (0) target = $region13
    $region12: #{tpu_custom_call.1} parent=1 // pred_region
      _
    $region13: #{tpu_custom_call.1} parent=1 // pred_fallthru
      _
    // Predicated region
    $region14: #{tpu_custom_call.1} parent=1 // pred_check
      _
    $region15: #{tpu_custom_call.1} parent=1 // pred_check_branch
      %38 = sbr.rel (0) target = $region17
    $region16: #{tpu_custom_call.1} parent=1 // pred_region
      %39 = dma.done [#allocation3], 256
    $region17: #{tpu_custom_call.1} parent=1 // pred_fallthru
      _
    // Predicated region
    $region18: #{tpu_custom_call.1} parent=1 // pred_check
      _
    $region19: #{tpu_custom_call.1} parent=1 // pred_check_branch
      %41 = sbr.rel (0) target = $region21
    $region20: #{tpu_custom_call.1} parent=1 // pred_region
      %42 = dma.done [#allocation6], 512
    $region21: #{tpu_custom_call.1} parent=1 // pred_fallthru
      _
    %v44 = vld [vmem:[#allocation2] sm:$0xf]
    %v45 = vld [vmem:[#allocation2 + $0x4] sm:$0xf]
    %v46 = vld [vmem:[#allocation2 + $0x8] sm:$0xf]
    %v47 = vld [vmem:[#allocation2 + $0xc] sm:$0xf]
    %v48 = vld [vmem:[#allocation5] sm:$0xf]
    %v49 = vld [vmem:[#allocation5 + $0x4] sm:$0xf]
    %v50 = vld [vmem:[#allocation5 + $0x8] sm:$0xf]
    %v51 = vld [vmem:[#allocation5 + $0xc] sm:$0xf]
    %v52 = vld [vmem:[#allocation5 + $0x10] sm:$0xf]
    %v53 = vld [vmem:[#allocation5 + $0x14] sm:$0xf]
    %v54 = vld [vmem:[#allocation5 + $0x18] sm:$0xf]
    %v55 = vld [vmem:[#allocation5 + $0x1c] sm:$0xf]
    %v56 = vld [vmem:[%s2] sm:$0x1]
    %v58 = vlaneseq
    %v59 = vshrl.u32 %v58, 7
    %v60 = vsub.s32 0, %v59
    %v61 = vrot.slane %v56, %v60
    %v67 = vunpack.c.l.b16 %v44
    %v68 = vunpack.c.l.b16 %v45
    %v69 = vunpack.c.l.b16 %v46
    %v70 = vunpack.c.l.b16 %v47
    %v71 = vpack.c.b16 %v68, %v67
    %v72 = vpack.c.b16 %v70, %v69
    %v81 = vunpack.c.l.b16 %v48
    %v82 = vunpack.c.l.b16 %v49
    %v83 = vunpack.c.l.b16 %v50
    %v84 = vunpack.c.l.b16 %v51
    %v85 = vunpack.c.l.b16 %v52
    %v86 = vunpack.c.l.b16 %v53
    %v87 = vunpack.c.l.b16 %v54
    %v88 = vunpack.c.l.b16 %v55
    %v89 = vpack.c.b16 %v82, %v81
    %v90 = vpack.c.b16 %v84, %v83
    %v91 = vpack.c.b16 %v86, %v85
    %v92 = vpack.c.b16 %v88, %v87
    %vm97 = vcmask 523264
    %v99 = vsel %vm97, %v71, 0
    %v102 = vsel %vm97, %v72, 0
    %104 = vmatprep.subr.bf16.mxu0 0
    %105 = vmatpush1.bf16.msra.mxu0 %v89
    %106 = vmatprep.subr.bf16.mxu0 0
    %107 = vmatpush1.bf16.msra.mxu0 %v90
    %108 = vmatprep.subr.bf16.mxu0 0
    %109 = vmatpush1.bf16.msra.mxu0 %v91
    %110 = vmatprep.subr.bf16.mxu0 0
    %111 = vmatpush1.bf16.msra.mxu0 %v92
    %112 = vmatprep.subr.bf16.mxu0 0
    %113 = vmatpush1.bf16.msra.mxu0 0
    %114 = vmatprep.subr.bf16.mxu0 0
    %115 = vmatpush1.bf16.msra.mxu0 0
    %116 = vmatprep.subr.bf16.mxu0 0
    %117 = vmatpush1.bf16.msra.mxu0 0
    %118 = vmatprep.subr.bf16.mxu0 0
    %119 = vmatpush1.bf16.msra.mxu0 0
    %120 = vmatprep.subr.bf16.mxu0 0
    %121 = vmatpush1.bf16.msra.mxu0 0
    %122 = vmatprep.subr.bf16.mxu0 0
    %123 = vmatpush1.bf16.msra.mxu0 0
    %124 = vmatprep.subr.bf16.mxu0 0
    %125 = vmatpush1.bf16.msra.mxu0 0
    %126 = vmatprep.subr.bf16.mxu0 0
    %127 = vmatpush1.bf16.msra.mxu0 0
    %128 = vmatprep.subr.bf16.mxu0 0
    %129 = vmatpush1.bf16.msra.mxu0 0
    %130 = vmatprep.subr.bf16.mxu0 0
    %131 = vmatpush1.bf16.msra.mxu0 0
    %132 = vmatprep.subr.bf16.mxu0 0
    %133 = vmatpush1.bf16.msra.mxu0 0
    %134 = vmatprep.subr.bf16.mxu0 0
    %135 = vmatpush1.bf16.msra.mxu0 0
    %136 = vmatprep.mubr.bf16.mxu0 0
    %137 = vmatmul.mubr.bf16.gmra.mrb[0].mxu0 %v99
    %v138 = vpop.f32.mrb[0].mxu0
    %v139 = vadd.f32 %v61, %v138
    %v140 = vpop.f32.mrb[0].mxu0
    %v141 = vpop.f32.mrb[0].mxu0
    %v142 = vadd.f32 %v61, %v141
    %v143 = vpop.f32.mrb[0].mxu0
    %144 = vmatprep.mubr.bf16.mxu0 0
    %145 = vmatmul.mubr.bf16.gmra.mrb[0].mxu0 %v102
    %v146 = vpop.f32.mrb[0].mxu0
    %v147 = vadd.f32 %v61, %v146
    %v148 = vpop.f32.mrb[0].mxu0
    %v149 = vpop.f32.mrb[0].mxu0
    %v150 = vadd.f32 %v61, %v149
    %v151 = vpop.f32.mrb[0].mxu0
    %152 = vdwg.mxu0
    %153 = vst [vmem:[#allocation7] sm:$0xff] %v139
    %154 = vst [vmem:[#allocation7 + $0x8] sm:$0xff] %v142
    %155 = vst [vmem:[#allocation7 + $0x10] sm:$0xff] %v147
    %156 = vst [vmem:[#allocation7 + $0x18] sm:$0xff] %v150
    // Predicated region
    $region22: #{tpu_custom_call.1} parent=1 // pred_check
      _
    $region23: #{tpu_custom_call.1} parent=1 // pred_check_branch
      %158 = sbr.rel (0) target = $region25
    $region24: #{tpu_custom_call.1} parent=1 // pred_region
      %s160 = ssub.s32 512, 512
      %161 = vsyncadd [#allocation4], %s160
      %s162 = sshll.u32 [#allocation7], 4
      %s163 = int_to_ptr.vmem [resolvable:$true] %s162
      %168 = dma.vmem_to_hbm [thread:$0]  %s163, 512, %s3, [#allocation4], 128, 128, 8
    $region25: #{tpu_custom_call.1} parent=1 // pred_fallthru
      _
    // Predicated region
    $region26: #{tpu_custom_call.1} parent=1 // pred_check
      _
    $region27: #{tpu_custom_call.1} parent=1 // pred_check_branch
      %170 = sbr.rel (0) target = $region29
    $region28: #{tpu_custom_call.1} parent=1 // pred_region
      %171 = dma.done [#allocation4], 512
    $region29: #{tpu_custom_call.1} parent=1 // pred_fallthru
      _
    %172 = vsyncpa [#allocation3], 1
    %173 = vsyncpa [#allocation6], 1
    %174 = vsyncpa [#allocation4], 1

</llo_original>
